<compile_context>
chip_gen: v7x
topology: tpu7x:2x2x1
jax: 0.10.0
libtpu: 0.0.40
codegen_flags: <defaults>
</compile_context>

<pallas_src>
import functools
import math

import jax
import jax.numpy as jnp
from jax.experimental import pallas as pl
from jax.experimental.pallas import tpu as pltpu

# Per-step working set is < 4 MiB even at tile_m=4096, so 32 MiB scoped VMEM is
# safe on v5e/v6e (128 MiB) and v7x (64 MiB physical).
_VMEM_LIMIT = 32 * 1024 * 1024
_ASPP_CFG = ((1, 1), (3, 2), (3, 5), (1, 1))   # (kernel_size, dilation) per branch


def _lane_tile(m, tile):
    """Largest multiple-of-128 lane tile <= m (so blocks never exceed the array
    and no pad is needed).  For sub-vreg arrays (m < 128) the caller pads the
    lane axis up to 128 -- a trivial cost at that size."""
    if m >= 128:
        return min(tile, (m // 128) * 128)
    return 128


# ---------------------------------------------------------------------------
# Pallas kernels
# ---------------------------------------------------------------------------
def _convT_kernel(x_ref, w_ref, b_ref, o_ref, *, activation):
    """One M-tile of a conv as a single wide-K matmul.
    x_ref: [K, tm] bf16 (im2col^T), w_ref: [Cout, K] bf16, b_ref: [Cout, 1] f32."""
    acc = jnp.dot(w_ref[...], x_ref[...], preferred_element_type=jnp.float32)
    acc = acc + b_ref[...]
    if activation == "relu":
        acc = jnp.maximum(acc, 0.0)
    elif activation == "sigmoid":
        acc = jax.nn.sigmoid(acc)
    o_ref[...] = acc.astype(o_ref.dtype)


def _convT_stats_kernel(x_ref, w_ref, b_ref, o_ref, s_ref, ss_ref, *, m_true, tm):
    """Conv tile (no activation) + per-tile bias-shifted sum / sum-of-squares
    partials feeding the following BatchNorm.  Grid stays "parallel": each tile
    writes its own [1, Cout, 1] partial block and the tiny [G, Cout] reduction
    happens in XLA.  Ragged / out-of-bounds lane columns are masked."""
    i = pl.program_id(0)
    bias = b_ref[...]                                                   # [Cout, 1]
    acc = jnp.dot(w_ref[...], x_ref[...], preferred_element_type=jnp.float32) + bias
    o_ref[...] = acc.astype(o_ref.dtype)
    col = i * tm + jax.lax.broadcasted_iota(jnp.int32, acc.shape, 1)
    centered = jnp.where(col < m_true, acc - bias, 0.0)     # bias-shifted for conditioning
    s_ref[...] = jnp.sum(centered, axis=1, keepdims=True)[None]         # [1, Cout, 1]
    ss_ref[...] = jnp.sum(centered * centered, axis=1, keepdims=True)[None]


def _aspp_fused_kernel(x0_ref, x1_ref, x2_ref, g_ref,
                       w0_ref, w1_ref, w2_ref, b_ref, o_ref, *, c4):
    """All four ASPP branches for one M tile, written directly in concatenated
    channel order: 1x1 (dil 1), 3x3 dil 2, 3x3 dil 5, broadcast GAP branch."""
    b = b_ref[...]                                                      # [3*c4, 1]

    def branch(w_ref, x_ref, k):
        y = jnp.dot(w_ref[...], x_ref[...], preferred_element_type=jnp.float32)
        return jnp.maximum(y + b[k * c4:(k + 1) * c4], 0.0)

    y0 = branch(w0_ref, x0_ref, 0)
    y1 = branch(w1_ref, x1_ref, 1)
    y2 = branch(w2_ref, x2_ref, 2)
    y3 = g_ref[...].astype(jnp.float32)        # GAP branch: conv + ReLU already applied
    o_ref[...] = jnp.concatenate([y0, y1, y2, y3], axis=0).astype(o_ref.dtype)


def _gap_conv_relu_kernel(x_ref, w_ref, b_ref, o_ref, acc_ref, *, hw_true, thw):
    """Tiled AdaptiveAvgPool2d(1) -> 1x1 conv -> ReLU.  The H*W reduction is a
    grid axis with a resident [C, N] f32 partial sum (constant VMEM footprint)."""
    i = pl.program_id(0)

    @pl.when(i == 0)
    def _():
        acc_ref[...] = jnp.zeros_like(acc_ref)

    x = x_ref[...].astype(jnp.float32)                                  # [C, N, thw]
    col = i * thw + jax.lax.broadcasted_iota(jnp.int32, x.shape, 2)
    x = jnp.where(col < hw_true, x, 0.0)
    acc_ref[...] += jnp.sum(x, axis=2)                                  # [C, N]

    @pl.when(i == pl.num_programs(0) - 1)
    def _():
        g = acc_ref[...] * (1.0 / hw_true)
        y = jnp.dot(w_ref[...], g, preferred_element_type=jnp.float32) + b_ref[...]
        o_ref[...] = jnp.maximum(y, 0.0)


# ---------------------------------------------------------------------------
# Wrappers around pallas_call
# ---------------------------------------------------------------------------
def _im2col_t(x, KH, KW, stride, padding, dilation):
    """Transposed im2col in the input dtype (call with bf16).
    x: [Cin, N, H, W] -> ([KH*KW*Cin, N*Ho*Wo], (N, Ho, Wo)); rows tap-major,
    channel-minor, matching w.reshape(KH*KW*Cin, Cout)."""
    Cin, N, H, W = x.shape
    Ho = (H + 2 * padding - dilation * (KH - 1) - 1) // stride + 1
    Wo = (W + 2 * padding - dilation * (KW - 1) - 1) // stride + 1
    M = N * Ho * Wo
    if KH == 1 and KW == 1 and stride == 1 and padding == 0:
        return x.reshape(Cin, M), (N, Ho, Wo)        # 1x1 conv: no tap gather
    xp = jnp.pad(x, ((0, 0), (0, 0), (padding, padding), (padding, padding)))
    rows = []
    for kh in range(KH):
        for kw in range(KW):
            h0, w0 = kh * dilation, kw * dilation
            sl = xp[:, :, h0:h0 + stride * (Ho - 1) + 1:stride,
                          w0:w0 + stride * (Wo - 1) + 1:stride]
            rows.append(sl.reshape(Cin, M))
    # TODO(synk): build these taps inside the conv kernel instead of materializing
    # the 9x-inflated copy in HBM.
    return jnp.concatenate(rows, axis=0), (N, Ho, Wo)


def conv2d(x, w, b, *, stride=1, padding=0, dilation=1, activation=None,
           out_dtype=jnp.bfloat16, collect_stats=False, tile_m=4096,
           pre_scale_shift_relu=None):
    """2-D conv, channel-first.  x: [Cin, N, H, W], w: [KH, KW, Cin, Cout] (HWIO),
    b: [Cout].  Optional pre_scale_shift_relu=(scale, shift) applies the folded
    BatchNorm affine + ReLU to x in XLA *before* the spatial zero-pad / im2col
    (fuses into the gather; padding semantics match PyTorch).
    Returns [Cout, N, Ho, Wo]; with collect_stats also per-channel bias-shifted
    (sum, sumsq) over the valid M columns."""
    KH, KW, Cin, Cout = w.shape
    if pre_scale_shift_relu is not None:
        sc, sh = pre_scale_shift_relu
        x = jnp.maximum(x.astype(jnp.float32) * sc[:, None, None, None]
                        + sh[:, None, None, None], 0.0)
    x = x.astype(jnp.bfloat16)                        # cast BEFORE the im2col gather
    x2t, (N, Ho, Wo) = _im2col_t(x, KH, KW, stride, padding, dilation)
    K, M = x2t.shape

    tm = _lane_tile(M, tile_m)
    if M < 128:                                       # tiny tensor: pad lanes to one vreg
        x2t = jnp.pad(x2t, ((0, 0), (0, 128 - M)))
    Mp = x2t.shape[1]
    grid_m = pl.cdiv(Mp, tm)

    wt = w.reshape(KH * KW * Cin, Cout).T.astype(jnp.bfloat16)          # [Cout, K]
    b2 = b.reshape(Cout, 1).astype(jnp.float32)

    in_specs = [pl.BlockSpec((K, tm), lambda i: (0, i)),
                pl.BlockSpec((Cout, K), lambda i: (0, 0)),
                pl.BlockSpec((Cout, 1), lambda i: (0, 0))]
    out_spec = pl.BlockSpec((Cout, tm), lambda i: (0, i))
    cparams = pltpu.CompilerParams(dimension_semantics=("parallel",),
                                   vmem_limit_bytes=_VMEM_LIMIT)

    if collect_stats:
        assert activation is None
        res, s_p, ss_p = pl.pallas_call(
            functools.partial(_convT_stats_kernel, m_true=M, tm=tm),
            grid=(grid_m,), in_specs=in_specs,
            out_specs=(out_spec,
                       pl.BlockSpec((1, Cout, 1), lambda i: (i, 0, 0)),
                       pl.BlockSpec((1, Cout, 1), lambda i: (i, 0, 0))),
            out_shape=(jax.ShapeDtypeStruct((Cout, Mp), out_dtype),
                       jax.ShapeDtypeStruct((grid_m, Cout, 1), jnp.float32),
                       jax.ShapeDtypeStruct((grid_m, Cout, 1), jnp.float32)),
            compiler_params=cparams,
        )(x2t, wt, b2)
        if Mp != M:
            res = res[:, :M]
        stats = (jnp.sum(s_p[:, :, 0], axis=0), jnp.sum(ss_p[:, :, 0], axis=0))
        return res.reshape(Cout, N, Ho, Wo), stats

    res = pl.pallas_call(
        functools.partial(_convT_kernel, activation=activation),
        grid=(grid_m,), in_specs=in_specs, out_specs=out_spec,
        out_shape=jax.ShapeDtypeStruct((Cout, Mp), out_dtype),
        compiler_params=cparams,
    )(x2t, wt, b2)
    if Mp != M:
        res = res[:, :M]
    return res.reshape(Cout, N, Ho, Wo)


def gap_conv_relu(x, w, b, *, tile_hw=4096):
    """ASPP global branch: tiled GAP -> 1x1 conv -> ReLU.
    x: [C, N, H, W], w: [1, 1, C, C4], b: [C4].  Returns [C4, N] f32."""
    C, N, H, W = x.shape
    C4 = w.shape[-1]
    HW = H * W
    x3 = x.reshape(C, N, HW)
    thw = _lane_tile(HW, tile_hw)
    if HW < 128:
        x3 = jnp.pad(x3, ((0, 0), (0, 0), (0, 128 - HW)))
    grid_hw = pl.cdiv(x3.shape[2], thw)
    w2 = w.reshape(C, C4).T.astype(jnp.float32)                          # [C4, C]
    return pl.pallas_call(
        functools.partial(_gap_conv_relu_kernel, hw_true=HW, thw=thw),
        grid=(grid_hw,),
        in_specs=[pl.BlockSpec((C, N, thw), lambda i: (0, 0, i)),
                  pl.BlockSpec((C4, C), lambda i: (0, 0)),
                  pl.BlockSpec((C4, 1), lambda i: (0, 0))],
        out_specs=pl.BlockSpec((C4, N), lambda i: (0, 0)),
        out_shape=jax.ShapeDtypeStruct((C4, N), jnp.float32),
        scratch_shapes=[pltpu.VMEM((C, N), jnp.float32)],
        compiler_params=pltpu.CompilerParams(
            dimension_semantics=("arbitrary",),        # sequential HW reduction
            vmem_limit_bytes=_VMEM_LIMIT),
    )(x3, w2, b.reshape(C4, 1).astype(jnp.float32))


def aspp_forward(x, p, *, tile_m=4096):
    """Fused ASPP(in=c, out=c//4), dilations (1, 2, 5, 1): one pallas_call computes
    the 1x1 and both dilated 3x3 branches and copies the broadcast GAP branch,
    writing the channel-concatenated [4*C4, N, H, W] result directly."""
    C, N, H, W = x.shape
    C4 = p["aspp0_w"].shape[-1]
    M = N * H * W

    g = gap_conv_relu(x, p["aspp3_w"], p["aspp3_b"])                     # [C4, N] f32

    x0 = x.reshape(C, M)                                                 # 1x1, dil 1
    x1, _ = _im2col_t(x, 3, 3, 1, 2, 2)                                  # 3x3, dil 2
    x2, _ = _im2col_t(x, 3, 3, 1, 5, 5)                                  # 3x3, dil 5
    gb = jnp.broadcast_to(g[:, :, None], (C4, N, H * W)).reshape(C4, M)
    gb = gb.astype(jnp.bfloat16)

    tm = _lane_tile(M, tile_m)
    if M < 128:
        pad = 128 - M
        x0, x1, x2, gb = tuple(jnp.pad(a, ((0, 0), (0, pad)))
                               for a in (x0, x1, x2, gb))
    Mp = x0.shape[1]
    grid_m = pl.cdiv(Mp, tm)

    w0 = p["aspp0_w"].reshape(C, C4).T.astype(jnp.bfloat16)              # [C4, C]
    w1 = p["aspp1_w"].reshape(9 * C, C4).T.astype(jnp.bfloat16)          # [C4, 9C]
    w2 = p["aspp2_w"].reshape(9 * C, C4).T.astype(jnp.bfloat16)
    b012 = jnp.concatenate([p["aspp0_b"], p["aspp1_b"], p["aspp2_b"]]
                           ).reshape(3 * C4, 1).astype(jnp.float32)

    out = pl.pallas_call(
        functools.partial(_aspp_fused_kernel, c4=C4),
        grid=(grid_m,),
        in_specs=[pl.BlockSpec((C, tm), lambda i: (0, i)),
                  pl.BlockSpec((9 * C, tm), lambda i: (0, i)),
                  pl.BlockSpec((9 * C, tm), lambda i: (0, i)),
                  pl.BlockSpec((C4, tm), lambda i: (0, i)),
                  pl.BlockSpec((C4, C), lambda i: (0, 0)),
                  pl.BlockSpec((C4, 9 * C), lambda i: (0, 0)),
                  pl.BlockSpec((C4, 9 * C), lambda i: (0, 0)),
                  pl.BlockSpec((3 * C4, 1), lambda i: (0, 0))],
        out_specs=pl.BlockSpec((4 * C4, tm), lambda i: (0, i)),
        out_shape=jax.ShapeDtypeStruct((4 * C4, Mp), jnp.bfloat16),
        compiler_params=pltpu.CompilerParams(
            dimension_semantics=("parallel",), vmem_limit_bytes=_VMEM_LIMIT),
    )(x0, x1, x2, gb, w0, w1, w2, b012)
    if Mp != M:
        out = out[:, :M]
    return out.reshape(4 * C4, N, H, W)


def upsample_nearest(x, out_hw):
    """F.interpolate(mode='nearest') semantics: src = floor(dst * in / out).
    x: [C, N, H, W]."""
    C, N, H, W = x.shape
    Ho, Wo = out_hw
    hi = (jnp.arange(Ho) * H) // Ho
    wi = (jnp.arange(Wo) * W) // Wo
    return x[:, :, hi][:, :, :, wi]


# ---------------------------------------------------------------------------
# Parameter init (deterministic, synthetic)
# ---------------------------------------------------------------------------
def _kaiming(key, kh, kw, cin, cout):
    fan_out = kh * kw * cout
    std = math.sqrt(2.0 / fan_out)
    return jax.random.normal(key, (kh, kw, cin, cout), jnp.float32) * std


def init_cam_params(key, inplanes, fpn_lvl=3, reduction_ratio=1):
    c = inplanes // reduction_ratio
    c4 = inplanes // (4 * reduction_ratio)
    keys = iter(jax.random.split(key, 64))
    p = {}
    p["dila_conv1_w"] = _kaiming(next(keys), 3, 3, inplanes * fpn_lvl // reduction_ratio, c)
    p["dila_conv1_b"] = jax.random.normal(next(keys), (c,), jnp.float32) * 0.01
    for i, (ks, _) in enumerate(_ASPP_CFG):
        p[f"aspp{i}_w"] = _kaiming(next(keys), ks, ks, c, c4)
        p[f"aspp{i}_b"] = jax.random.normal(next(keys), (c4,), jnp.float32) * 0.01
    p["dila_conv3_w"] = _kaiming(next(keys), 3, 3, 4 * c4, c)
    p["dila_conv3_b"] = jax.random.normal(next(keys), (c,), jnp.float32) * 0.01
    p["bn_gamma"] = jnp.ones((c,), jnp.float32)     # nn.BatchNorm2d default init
    p["bn_beta"] = jnp.zeros((c,), jnp.float32)
    for i in range(fpn_lvl):
        p[f"down{i}_w"] = _kaiming(next(keys), 3, 3, c, c)
        p[f"down{i}_b"] = jax.random.normal(next(keys), (c,), jnp.float32) * 0.01
        p[f"att{i}_w"] = _kaiming(next(keys), 3, 3, c, 1)
        p[f"att{i}_b"] = jax.random.normal(next(keys), (1,), jnp.float32) * 0.01
    return p


# ---------------------------------------------------------------------------
# Module forward pass
# ---------------------------------------------------------------------------
def cam_forward(xs_nchw, p, fpn_lvl=3, *, bn_eps=1e-5):
    # Channel-first bf16 [C, N, H, W]: the big spatial dim maps to lanes; casting
    # to bf16 here (before upsample / concat / im2col) halves XLA-side traffic.
    xs = [jnp.transpose(x, (1, 0, 2, 3)).astype(jnp.bfloat16) for x in xs_nchw]
    prev_hw = xs[0].shape[2:]
    feats = [xs[0]] + [upsample_nearest(x, prev_hw) for x in xs[1:]]
    # TODO(synk): fold the nearest-upsample + concat gather into the first conv's
    # input index_map (scalar prefetch) instead of materializing `multi`.
    multi = jnp.concatenate(feats, axis=0)

    # dila_conv: Conv3x3 -> ASPP -> Conv3x3 (per-tile BN partial stats) -> BN+ReLU
    f = conv2d(multi, p["dila_conv1_w"], p["dila_conv1_b"], padding=1)
    f = aspp_forward(f, p)
    f, (s, ss) = conv2d(f, p["dila_conv3_w"], p["dila_conv3_b"], padding=1,
                        collect_stats=True)

    C, N, H, W = f.shape
    M = N * H * W
    mean_c = s / M                               # stats are bias-shifted: sum(x - bias)
    mean = p["dila_conv3_b"] + mean_c
    var = jnp.maximum(ss / M - mean_c * mean_c, 0.0)   # biased var (training-mode BN)
    scale = p["bn_gamma"] * jax.lax.rsqrt(var + bn_eps)
    shift = p["bn_beta"] - mean * scale

    atts = []
    lvl = f
    pre = (scale, shift)     # BN apply + ReLU folded into down_conv[0]'s input path
    for i in range(fpn_lvl):
        stride = 1 if i == 0 else 2
        lvl = conv2d(lvl, p[f"down{i}_w"], p[f"down{i}_b"], stride=stride, padding=1,
                     pre_scale_shift_relu=pre)
        pre = None
        att = conv2d(lvl, p[f"att{i}_w"], p[f"att{i}_b"], padding=1,
                     activation="sigmoid", out_dtype=jnp.float32)        # [1, N, h, w]
        atts.append(jnp.transpose(att, (1, 0, 2, 3)))                    # NCHW [N, 1, h, w]
    return atts


# ---------------------------------------------------------------------------
if __name__ == "__main__":
    key = jax.random.PRNGKey(0)
    inplanes, fpn_lvl = 8, 3
    N, H = 2, 16

    k_in, k_par = jax.random.split(key)
    k_lvls = jax.random.split(k_in, fpn_lvl)
    xs = []
    for i in range(fpn_lvl):
        s = H // (2 ** i)
        xs.append(jax.random.normal(k_lvls[i], (N, inplanes, s, s), jnp.float32))

    params = init_cam_params(k_par, inplanes, fpn_lvl)
    outs = cam_forward(xs, params, fpn_lvl)
    for o in outs:
        jax.block_until_ready(o)

    assert outs[0].shape == (N, 1, H, H)
    assert outs[1].shape == (N, 1, H // 2, H // 2)
    assert outs[2].shape == (N, 1, H // 4, H // 4)
    assert all(bool(jnp.all((o >= 0.0) & (o <= 1.0))) for o in outs)   # sigmoid range
    print("KERNEL_OK")
</pallas_src>

<mosaic_0001>
module attributes {stable_mosaic.version = 11 : i64} {
  func.func @_convT_kernel(%arg0: i32, %arg1: memref<216x512xbf16, #tpu.memory_space<vmem>>, %arg2: memref<8x216xbf16, #tpu.memory_space<vmem>>, %arg3: memref<8x1xf32, #tpu.memory_space<vmem>>, %arg4: memref<8x512xbf16, #tpu.memory_space<vmem>>) attributes {dimension_semantics = [#tpu.dimension_semantics<parallel>], iteration_bounds = array<i64: 1>, scalar_prefetch = 0 : i64, scratch_operands = 0 : i64, tpu.core_type = #tpu.core_type<tc>, window_params = [{transform_indices = @transform_0, window_bounds = array<i64: 216, 512>}, {pipeline_mode = #tpu.pipeline_mode<synchronous>, transform_indices = @transform_1, window_bounds = array<i64: 8, 216>}, {pipeline_mode = #tpu.pipeline_mode<synchronous>, transform_indices = @transform_2, window_bounds = array<i64: 8, 1>}, {transform_indices = @transform_3, window_bounds = array<i64: 8, 512>}]} {
    %c0 = arith.constant 0 : index
    %c0_0 = arith.constant 0 : index
    %0 = vector.load %arg2[%c0, %c0_0] : memref<8x216xbf16, #tpu.memory_space<vmem>>, vector<8x216xbf16>
    %c0_1 = arith.constant 0 : index
    %c0_2 = arith.constant 0 : index
    %1 = vector.load %arg1[%c0_1, %c0_2] : memref<216x512xbf16, #tpu.memory_space<vmem>>, vector<216x512xbf16>
    %cst = arith.constant dense<0.000000e+00> : vector<8x512xf32>
    %2 = tpu.matmul %0, %1, %cst {dimension_numbers = #tpu.dot_dimension_numbers<[1], [0], [0], [1], [0, 0, 1, 1], [], []>} : vector<8x216xbf16>, vector<216x512xbf16>, vector<8x512xf32> -> vector<8x512xf32>
    %c0_3 = arith.constant 0 : index
    %c0_4 = arith.constant 0 : index
    %3 = vector.load %arg3[%c0_3, %c0_4] : memref<8x1xf32, #tpu.memory_space<vmem>>, vector<8x1xf32>
    %4 = vector.broadcast %3 : vector<8x1xf32> to vector<8x512xf32>
    %5 = arith.addf %2, %4 : vector<8x512xf32>
    %6 = arith.truncf %5 : vector<8x512xf32> to vector<8x512xbf16>
    %c0_5 = arith.constant 0 : index
    %c0_6 = arith.constant 0 : index
    %7 = vector.load %arg4[%c0_5, %c0_6] : memref<8x512xbf16, #tpu.memory_space<vmem>>, vector<8x512xbf16>
    tpu.vector_store %arg4[%c0_5, %c0_6], %6 {strides = array<i32>} : memref<8x512xbf16, #tpu.memory_space<vmem>>, vector<8x512xbf16>,
    return
  }
  func.func @transform_0(%arg0: i32) -> (i32, i32) {
    %c0_i32 = arith.constant 0 : i32
    %c0_i32_0 = arith.constant 0 : i32
    return %c0_i32, %arg0 : i32, i32
  }
  func.func @transform_1(%arg0: i32) -> (i32, i32) {
    %c0_i32 = arith.constant 0 : i32
    %c0_i32_0 = arith.constant 0 : i32
    %c0_i32_1 = arith.constant 0 : i32
    return %c0_i32, %c0_i32_0 : i32, i32
  }
  func.func @transform_2(%arg0: i32) -> (i32, i32) {
    %c0_i32 = arith.constant 0 : i32
    %c0_i32_0 = arith.constant 0 : i32
    %c0_i32_1 = arith.constant 0 : i32
    return %c0_i32, %c0_i32_0 : i32, i32
  }
  func.func @transform_3(%arg0: i32) -> (i32, i32) {
    %c0_i32 = arith.constant 0 : i32
    %c0_i32_0 = arith.constant 0 : i32
    return %c0_i32, %arg0 : i32, i32
  }
}

</mosaic_0001>

<llo_original>
// kernel: tpu_custom_call.1
$region0: #{tpu_custom_call.1}
  #allocation0 [shape = 'u32[]', space=smem, size = 0x4, offset = 0x4, fixed_abs, tag = 'smem constant byte address 0x4 - core index']
  #allocation1 [shape = 'u32[144,128]{1,0:T(1,128)}', space=vmem, size = 0x12000, scoped, tag = 'internal scratch']
  %s0 = inlined_call_operand.hbm [shape: bf16[216,512], index: 0, kind: input, shape index: {}]
  %s1 = inlined_call_operand.vmem [shape: bf16[8,216], index: 1, kind: input, shape index: {}]
  %s2 = inlined_call_operand.vmem [shape: f32[8,1], index: 2, kind: input, shape index: {}]
  %s3 = inlined_call_operand.hbm [shape: bf16[8,512], index: 3, kind: output, shape index: {}]
  %s4 = sld [smem:[#allocation0]]
  $region26: #{tpu_custom_call.1} parent=0
    _
  %s6 = ssub.s32 1, %s4
  %s7 = scalar_select 0, %s6, %s4
  $region1: #{tpu_custom_call.1} parent=0
    #allocation2 [shape = 'u8[221184]{0}', space=vmem, size = 0x36000, scoped, tag = 'input window, operand 0, single buffered']
    #allocation3 [shape = 's32[1]{0}', space=sflag, size = 0x4, scoped, tag = 'scoped memory for tpu_custom_call.1']
    #allocation4 [shape = 's32[1]{0}', space=sflag, size = 0x4, scoped, tag = 'scoped memory for tpu_custom_call.1']
    #allocation5 [shape = 'u8[8192]{0}', space=vmem, size = 0x2000, scoped, tag = 'output window, operand 0, single buffered']
    %8 = vsyncpa [#allocation3], 0
    %9 = vsyncpa [#allocation4], 0
    // Predicated region
    $region2: #{tpu_custom_call.1} parent=1 // pred_check
      _
    $region3: #{tpu_custom_call.1} parent=1 // pred_check_branch
      %11 = sbr.rel (0) target = $region5
    $region4: #{tpu_custom_call.1} parent=1 // pred_region
      %s13 = ssub.s32 6912, 6912
      %14 = vsyncadd [#allocation3], %s13
      %s15 = sshll.u32 [#allocation2], 4
      %s16 = int_to_ptr.vmem [resolvable:$true] %s15
      %21 = dma.hbm_to_vmem [thread:$0]  %s0, 6912, %s16, [#allocation3], 256, 256, 16
    $region5: #{tpu_custom_call.1} parent=1 // pred_fallthru
      _
    // Predicated region
    $region6: #{tpu_custom_call.1} parent=1 // pred_check
      _
    $region7: #{tpu_custom_call.1} parent=1 // pred_check_branch
      %23 = sbr.rel (0) target = $region9
    $region8: #{tpu_custom_call.1} parent=1 // pred_region
      _
    $region9: #{tpu_custom_call.1} parent=1 // pred_fallthru
      _
    // Predicated region
    $region10: #{tpu_custom_call.1} parent=1 // pred_check
      _
    $region11: #{tpu_custom_call.1} parent=1 // pred_check_branch
      %25 = sbr.rel (0) target = $region13
    $region12: #{tpu_custom_call.1} parent=1 // pred_region
      _
    $region13: #{tpu_custom_call.1} parent=1 // pred_fallthru
      _
    // Predicated region
    $region14: #{tpu_custom_call.1} parent=1 // pred_check
      _
    $region15: #{tpu_custom_call.1} parent=1 // pred_check_branch
      %27 = sbr.rel (0) target = $region17
    $region16: #{tpu_custom_call.1} parent=1 // pred_region
      %28 = dma.done [#allocation3], 6912
    $region17: #{tpu_custom_call.1} parent=1 // pred_fallthru
      _
    %v30 = vld [vmem:[%s1] sm:$0xff]
    %v31 = vld [vmem:[#allocation2] sm:$0xff]
    %v32 = vld [vmem:[#allocation2 + $0x8] sm:$0xff]
    %v33 = vld [vmem:[#allocation2 + $0x10] sm:$0xff]
    %v34 = vld [vmem:[#allocation2 + $0x18] sm:$0xff]
    %v35 = vld [vmem:[#allocation2 + $0x20] sm:$0xff]
    %v36 = vld [vmem:[#allocation2 + $0x28] sm:$0xff]
    %v37 = vld [vmem:[#allocation2 + $0x30] sm:$0xff]
    %v38 = vld [vmem:[#allocation2 + $0x38] sm:$0xff]
    %v39 = vld [vmem:[#allocation2 + $0x40] sm:$0xff]
    %v40 = vld [vmem:[#allocation2 + $0x48] sm:$0xff]
    %v41 = vld [vmem:[#allocation2 + $0x50] sm:$0xff]
    %v42 = vld [vmem:[#allocation2 + $0x58] sm:$0xff]
    %v43 = vld [vmem:[#allocation2 + $0x60] sm:$0xff]
    %v44 = vld [vmem:[#allocation2 + $0x68] sm:$0xff]
    %v45 = vld [vmem:[#allocation2 + $0x70] sm:$0xff]
    %v46 = vld [vmem:[#allocation2 + $0x78] sm:$0xff]
    %v47 = vld [vmem:[#allocation2 + $0x80] sm:$0xff]
    %v48 = vld [vmem:[#allocation2 + $0x88] sm:$0xff]
    %v49 = vld [vmem:[#allocation2 + $0x90] sm:$0xff]
    %v50 = vld [vmem:[#allocation2 + $0x98] sm:$0xff]
    %v51 = vld [vmem:[#allocation2 + $0xa0] sm:$0xff]
    %v52 = vld [vmem:[#allocation2 + $0xa8] sm:$0xff]
    %v53 = vld [vmem:[#allocation2 + $0xb0] sm:$0xff]
    %v54 = vld [vmem:[#allocation2 + $0xb8] sm:$0xff]
    %v55 = vld [vmem:[#allocation2 + $0xc0] sm:$0xff]
    %v56 = vld [vmem:[#allocation2 + $0xc8] sm:$0xff]
    %v57 = vld [vmem:[#allocation2 + $0xd0] sm:$0xff]
    %v58 = vld [vmem:[#allocation2 + $0xd8] sm:$0xff]
    %v59 = vld [vmem:[#allocation2 + $0xe0] sm:$0xff]
    %v60 = vld [vmem:[#allocation2 + $0xe8] sm:$0xff]
    %v61 = vld [vmem:[#allocation2 + $0xf0] sm:$0xff]
    %v62 = vld [vmem:[#allocation2 + $0xf8] sm:$0xff]
    %v63 = vld [vmem:[#allocation2 + $0x100] sm:$0xff]
    %v64 = vld [vmem:[#allocation2 + $0x108] sm:$0xff]
    %v65 = vld [vmem:[#allocation2 + $0x110] sm:$0xff]
    %v66 = vld [vmem:[#allocation2 + $0x118] sm:$0xff]
    %v67 = vld [vmem:[#allocation2 + $0x120] sm:$0xff]
    %v68 = vld [vmem:[#allocation2 + $0x128] sm:$0xff]
    %v69 = vld [vmem:[#allocation2 + $0x130] sm:$0xff]
    %v70 = vld [vmem:[#allocation2 + $0x138] sm:$0xff]
    %v71 = vld [vmem:[#allocation2 + $0x140] sm:$0xff]
    %v72 = vld [vmem:[#allocation2 + $0x148] sm:$0xff]
    %v73 = vld [vmem:[#allocation2 + $0x150] sm:$0xff]
    %v74 = vld [vmem:[#allocation2 + $0x158] sm:$0xff]
    %v75 = vld [vmem:[#allocation2 + $0x160] sm:$0xff]
    %v76 = vld [vmem:[#allocation2 + $0x168] sm:$0xff]
    %v77 = vld [vmem:[#allocation2 + $0x170] sm:$0xff]
    %v78 = vld [vmem:[#allocation2 + $0x178] sm:$0xff]
    %v79 = vld [vmem:[#allocation2 + $0x180] sm:$0xff]
    %v80 = vld [vmem:[#allocation2 + $0x188] sm:$0xff]
    %v81 = vld [vmem:[#allocation2 + $0x190] sm:$0xff]
    %v82 = vld [vmem:[#allocation2 + $0x198] sm:$0xff]
    %v83 = vld [vmem:[#allocation2 + $0x1a0] sm:$0xff]
    %v84 = vld [vmem:[#allocation2 + $0x1a8] sm:$0xff]
    %v85 = vld [vmem:[%s2] sm:$0xff]
    %87 = vset.pattern.permute.xlu0 0
    %88 = vperm.xlu0 %87, %v85
    %v89 = vpop.permute.xlu0 %88
    %v92 = vunpack.c.l.b16 %v30
    %v93 = vunpack.c.h.b16 %v30
    %v94 = vpack.c.b16 %v92, %v92
    %v95 = vpack.c.b16 %v93, %v93
    %v151 = vunpack.c.l.b16 %v31
    %v152 = vunpack.c.h.b16 %v31
    %v153 = vunpack.c.l.b16 %v32
    %v154 = vunpack.c.h.b16 %v32
    %v155 = vunpack.c.l.b16 %v33
    %v156 = vunpack.c.h.b16 %v33
    %v157 = vunpack.c.l.b16 %v34
    %v158 = vunpack.c.h.b16 %v34
    %v159 = vunpack.c.l.b16 %v35
    %v160 = vunpack.c.h.b16 %v35
    %v161 = vunpack.c.l.b16 %v36
    %v162 = vunpack.c.h.b16 %v36
    %v163 = vunpack.c.l.b16 %v37
    %v164 = vunpack.c.h.b16 %v37
    %v165 = vunpack.c.l.b16 %v38
    %v166 = vunpack.c.h.b16 %v38
    %v167 = vunpack.c.l.b16 %v39
    %v168 = vunpack.c.h.b16 %v39
    %v169 = vunpack.c.l.b16 %v40
    %v170 = vunpack.c.h.b16 %v40
    %v171 = vunpack.c.l.b16 %v41
    %v172 = vunpack.c.h.b16 %v41
    %v173 = vunpack.c.l.b16 %v42
    %v174 = vunpack.c.h.b16 %v42
    %v175 = vunpack.c.l.b16 %v43
    %v176 = vunpack.c.h.b16 %v43
    %v177 = vunpack.c.l.b16 %v44
    %v178 = vunpack.c.h.b16 %v44
    %v179 = vunpack.c.l.b16 %v45
    %v180 = vunpack.c.h.b16 %v45
    %v181 = vunpack.c.l.b16 %v46
    %v182 = vunpack.c.h.b16 %v46
    %v183 = vunpack.c.l.b16 %v47
    %v184 = vunpack.c.h.b16 %v47
    %v185 = vunpack.c.l.b16 %v48
    %v186 = vunpack.c.h.b16 %v48
    %v187 = vunpack.c.l.b16 %v49
    %v188 = vunpack.c.h.b16 %v49
    %v189 = vunpack.c.l.b16 %v50
    %v190 = vunpack.c.h.b16 %v50
    %v191 = vunpack.c.l.b16 %v51
    %v192 = vunpack.c.h.b16 %v51
    %v193 = vunpack.c.l.b16 %v52
    %v194 = vunpack.c.h.b16 %v52
    %v195 = vunpack.c.l.b16 %v53
    %v196 = vunpack.c.h.b16 %v53
    %v197 = vunpack.c.l.b16 %v54
    %v198 = vunpack.c.h.b16 %v54
    %v199 = vunpack.c.l.b16 %v55
    %v200 = vunpack.c.h.b16 %v55
    %v201 = vunpack.c.l.b16 %v56
    %v202 = vunpack.c.h.b16 %v56
    %v203 = vunpack.c.l.b16 %v57
    %v204 = vunpack.c.h.b16 %v57
    %v205 = vunpack.c.l.b16 %v58
    %v206 = vunpack.c.h.b16 %v58
    %v207 = vunpack.c.l.b16 %v59
    %v208 = vunpack.c.h.b16 %v59
    %v209 = vunpack.c.l.b16 %v60
    %v210 = vunpack.c.h.b16 %v60
    %v211 = vunpack.c.l.b16 %v61
    %v212 = vunpack.c.h.b16 %v61
    %v213 = vunpack.c.l.b16 %v62
    %v214 = vunpack.c.h.b16 %v62
    %v215 = vunpack.c.l.b16 %v63
    %v216 = vunpack.c.h.b16 %v63
    %v217 = vunpack.c.l.b16 %v64
    %v218 = vunpack.c.h.b16 %v64
    %v219 = vunpack.c.l.b16 %v65
    %v220 = vunpack.c.h.b16 %v65
    %v221 = vunpack.c.l.b16 %v66
    %v222 = vunpack.c.h.b16 %v66
    %v223 = vunpack.c.l.b16 %v67
    %v224 = vunpack.c.h.b16 %v67
    %v225 = vunpack.c.l.b16 %v68
    %v226 = vunpack.c.h.b16 %v68
    %v227 = vunpack.c.l.b16 %v69
    %v228 = vunpack.c.h.b16 %v69
    %v229 = vunpack.c.l.b16 %v70
    %v230 = vunpack.c.h.b16 %v70
    %v231 = vunpack.c.l.b16 %v71
    %v232 = vunpack.c.h.b16 %v71
    %v233 = vunpack.c.l.b16 %v72
    %v234 = vunpack.c.h.b16 %v72
    %v235 = vunpack.c.l.b16 %v73
    %v236 = vunpack.c.h.b16 %v73
    %v237 = vunpack.c.l.b16 %v74
    %v238 = vunpack.c.h.b16 %v74
    %v239 = vunpack.c.l.b16 %v75
    %v240 = vunpack.c.h.b16 %v75
    %v241 = vunpack.c.l.b16 %v76
    %v242 = vunpack.c.h.b16 %v76
    %v243 = vunpack.c.l.b16 %v77
    %v244 = vunpack.c.h.b16 %v77
    %v245 = vunpack.c.l.b16 %v78
    %v246 = vunpack.c.h.b16 %v78
    %v247 = vunpack.c.l.b16 %v79
    %v248 = vunpack.c.h.b16 %v79
    %v249 = vunpack.c.l.b16 %v80
    %v250 = vunpack.c.h.b16 %v80
    %v251 = vunpack.c.l.b16 %v81
    %v252 = vunpack.c.h.b16 %v81
    %v253 = vunpack.c.l.b16 %v82
    %v254 = vunpack.c.h.b16 %v82
    %v255 = vunpack.c.l.b16 %v83
    %v256 = vunpack.c.h.b16 %v83
    %v257 = vunpack.c.l.b16 %v84
    %v258 = vunpack.c.h.b16 %v84
    %v259 = vpack.c.b16 %v155, %v151
    %v260 = vpack.c.b16 %v156, %v152
    %v261 = vpack.c.b16 %v157, %v153
    %v262 = vpack.c.b16 %v158, %v154
    %v263 = vpack.c.b16 %v163, %v159
    %v264 = vpack.c.b16 %v164, %v160
    %v265 = vpack.c.b16 %v165, %v161
    %v266 = vpack.c.b16 %v166, %v162
    %v267 = vpack.c.b16 %v171, %v167
    %v268 = vpack.c.b16 %v172, %v168
    %v269 = vpack.c.b16 %v173, %v169
    %v270 = vpack.c.b16 %v174, %v170
    %v271 = vpack.c.b16 %v179, %v175
    %v272 = vpack.c.b16 %v180, %v176
    %v273 = vpack.c.b16 %v181, %v177
    %v274 = vpack.c.b16 %v182, %v178
    %v275 = vpack.c.b16 %v187, %v183
    %v276 = vpack.c.b16 %v188, %v184
    %v277 = vpack.c.b16 %v189, %v185
    %v278 = vpack.c.b16 %v190, %v186
    %v279 = vpack.c.b16 %v195, %v191
    %v280 = vpack.c.b16 %v196, %v192
    %v281 = vpack.c.b16 %v197, %v193
    %v282 = vpack.c.b16 %v198, %v194
    %v283 = vpack.c.b16 %v203, %v199
    %v284 = vpack.c.b16 %v204, %v200
    %v285 = vpack.c.b16 %v205, %v201
    %v286 = vpack.c.b16 %v206, %v202
    %v287 = vpack.c.b16 %v211, %v207
    %v288 = vpack.c.b16 %v212, %v208
    %v289 = vpack.c.b16 %v213, %v209
    %v290 = vpack.c.b16 %v214, %v210
    %v291 = vpack.c.b16 %v219, %v215
    %v292 = vpack.c.b16 %v220, %v216
    %v293 = vpack.c.b16 %v221, %v217
    %v294 = vpack.c.b16 %v222, %v218
    %v295 = vpack.c.b16 %v227, %v223
    %v296 = vpack.c.b16 %v228, %v224
    %v297 = vpack.c.b16 %v229, %v225
    %v298 = vpack.c.b16 %v230, %v226
    %v299 = vpack.c.b16 %v235, %v231
    %v300 = vpack.c.b16 %v236, %v232
    %v301 = vpack.c.b16 %v237, %v233
    %v302 = vpack.c.b16 %v238, %v234
    %v303 = vpack.c.b16 %v243, %v239
    %v304 = vpack.c.b16 %v244, %v240
    %v305 = vpack.c.b16 %v245, %v241
    %v306 = vpack.c.b16 %v246, %v242
    %v307 = vpack.c.b16 %v251, %v247
    %v308 = vpack.c.b16 %v252, %v248
    %v309 = vpack.c.b16 %v253, %v249
    %v310 = vpack.c.b16 %v254, %v250
    %v311 = vpack.c.b16 %v255, %v255
    %v312 = vpack.c.b16 %v256, %v256
    %v313 = vpack.c.b16 %v257, %v257
    %v314 = vpack.c.b16 %v258, %v258
    %vm367 = vcmask 719872
    %v369 = vsel %vm367, %v95, 0
    %vm371 = vcmask 1043456
    %v373 = vsel %vm371, %v311, 0
    %v376 = vsel %vm371, %v312, 0
    %v379 = vsel %vm371, %v313, 0
    %v382 = vsel %vm371, %v314, 0
    %384 = vmatprep.subr.bf16.mxu0 %v260
    %385 = vmatpush1.bf16.msra.mxu0 %v259
    %386 = vmatprep.subr.bf16.mxu0 %v264
    %387 = vmatpush1.bf16.msra.mxu0 %v263
    %388 = vmatprep.subr.bf16.mxu0 %v268
    %389 = vmatpush1.bf16.msra.mxu0 %v267
    %390 = vmatprep.subr.bf16.mxu0 %v272
    %391 = vmatpush1.bf16.msra.mxu0 %v271
    %392 = vmatprep.subr.bf16.mxu0 %v276
    %393 = vmatpush1.bf16.msra.mxu0 %v275
    %394 = vmatprep.subr.bf16.mxu0 %v280
    %395 = vmatpush1.bf16.msra.mxu0 %v279
    %396 = vmatprep.subr.bf16.mxu0 %v284
    %397 = vmatpush1.bf16.msra.mxu0 %v283
    %398 = vmatprep.subr.bf16.mxu0 %v288
    %399 = vmatpush1.bf16.msra.mxu0 %v287
    %400 = vmatprep.subr.bf16.mxu0 %v292
    %401 = vmatpush1.bf16.msra.mxu0 %v291
    %402 = vmatprep.subr.bf16.mxu0 %v296
    %403 = vmatpush1.bf16.msra.mxu0 %v295
    %404 = vmatprep.subr.bf16.mxu0 %v300
    %405 = vmatpush1.bf16.msra.mxu0 %v299
    %406 = vmatprep.subr.bf16.mxu0 %v304
    %407 = vmatpush1.bf16.msra.mxu0 %v303
    %408 = vmatprep.subr.bf16.mxu0 %v308
    %409 = vmatpush1.bf16.msra.mxu0 %v307
    %410 = vmatprep.subr.bf16.mxu0 %v376
    %411 = vmatpush1.bf16.msra.mxu0 %v373
    %412 = vmatprep.subr.bf16.mxu0 0
    %413 = vmatpush1.bf16.msra.mxu0 0
    %414 = vmatprep.subr.bf16.mxu0 0
    %415 = vmatpush1.bf16.msra.mxu0 0
    %416 = vmatprep.mubr.bf16.mxu0 %v369
    %417 = vmatmul.mubr.bf16.gmra.mrb[0].mxu0 %v94
    %v418 = vpop.f32.mrb[0].mxu0
    %v419 = vadd.f32 %v89, %v418
    %v420 = vpop.f32.mrb[0].mxu0
    %v421 = vadd.f32 %v89, %v420
    %v422 = vpop.f32.mrb[0].mxu0
    %v423 = vpop.f32.mrb[0].mxu0
    %424 = vdwg.mxu0
    %425 = vmatprep.subr.bf16.mxu0 %v262
    %426 = vmatpush1.bf16.msra.mxu0 %v261
    %427 = vmatprep.subr.bf16.mxu0 %v266
    %428 = vmatpush1.bf16.msra.mxu0 %v265
    %429 = vmatprep.subr.bf16.mxu0 %v270
    %430 = vmatpush1.bf16.msra.mxu0 %v269
    %431 = vmatprep.subr.bf16.mxu0 %v274
    %432 = vmatpush1.bf16.msra.mxu0 %v273
    %433 = vmatprep.subr.bf16.mxu0 %v278
    %434 = vmatpush1.bf16.msra.mxu0 %v277
    %435 = vmatprep.subr.bf16.mxu0 %v282
    %436 = vmatpush1.bf16.msra.mxu0 %v281
    %437 = vmatprep.subr.bf16.mxu0 %v286
    %438 = vmatpush1.bf16.msra.mxu0 %v285
    %439 = vmatprep.subr.bf16.mxu0 %v290
    %440 = vmatpush1.bf16.msra.mxu0 %v289
    %441 = vmatprep.subr.bf16.mxu0 %v294
    %442 = vmatpush1.bf16.msra.mxu0 %v293
    %443 = vmatprep.subr.bf16.mxu0 %v298
    %444 = vmatpush1.bf16.msra.mxu0 %v297
    %445 = vmatprep.subr.bf16.mxu0 %v302
    %446 = vmatpush1.bf16.msra.mxu0 %v301
    %447 = vmatprep.subr.bf16.mxu0 %v306
    %448 = vmatpush1.bf16.msra.mxu0 %v305
    %449 = vmatprep.subr.bf16.mxu0 %v310
    %450 = vmatpush1.bf16.msra.mxu0 %v309
    %451 = vmatprep.subr.bf16.mxu0 %v382
    %452 = vmatpush1.bf16.msra.mxu0 %v379
    %453 = vmatprep.subr.bf16.mxu0 0
    %454 = vmatpush1.bf16.msra.mxu0 0
    %455 = vmatprep.subr.bf16.mxu0 0
    %456 = vmatpush1.bf16.msra.mxu0 0
    %457 = vmatprep.mubr.bf16.mxu0 %v369
    %458 = vmatmul.mubr.bf16.gmra.mrb[0].mxu0 %v94
    %v459 = vpop.f32.mrb[0].mxu0
    %v460 = vadd.f32 %v89, %v459
    %v461 = vpop.f32.mrb[0].mxu0
    %v462 = vadd.f32 %v89, %v461
    %v463 = vpop.f32.mrb[0].mxu0
    %v464 = vpop.f32.mrb[0].mxu0
    %465 = vdwg.mxu0
    %v466 = vpack.c.bf16 %v419, %v419
    %v467 = vpack.c.bf16 %v421, %v421
    %v468 = vpack.c.bf16 %v460, %v460
    %v469 = vpack.c.bf16 %v462, %v462
    %v474 = vunpack.c.l.b16 %v466
    %v475 = vunpack.c.l.b16 %v467
    %v476 = vunpack.c.l.b16 %v468
    %v477 = vunpack.c.l.b16 %v469
    %v478 = vpack.c.b16 %v475, %v474
    %v479 = vpack.c.b16 %v477, %v476
    %482 = vst [vmem:[#allocation5] sm:$0xff] %v478
    %483 = vst [vmem:[#allocation5 + $0x8] sm:$0xff] %v479
    // Predicated region
    $region18: #{tpu_custom_call.1} parent=1 // pred_check
      _
    $region19: #{tpu_custom_call.1} parent=1 // pred_check_branch
      %485 = sbr.rel (0) target = $region21
    $region20: #{tpu_custom_call.1} parent=1 // pred_region
      %s487 = ssub.s32 256, 256
      %488 = vsyncadd [#allocation4], %s487
      %s490 = sshll.u32 [#allocation5], 4
      %s491 = int_to_ptr.vmem [resolvable:$true] %s490
      %493 = dma.vmem_to_hbm [thread:$0]  %s491, 256, %s3, [#allocation4]
    $region21: #{tpu_custom_call.1} parent=1 // pred_fallthru
      _
    // Predicated region
    $region22: #{tpu_custom_call.1} parent=1 // pred_check
      _
    $region23: #{tpu_custom_call.1} parent=1 // pred_check_branch
      %495 = sbr.rel (0) target = $region25
    $region24: #{tpu_custom_call.1} parent=1 // pred_region
      %496 = dma.done [#allocation4], 256
    $region25: #{tpu_custom_call.1} parent=1 // pred_fallthru
      _
    %497 = vsyncpa [#allocation3], 1
    %498 = vsyncpa [#allocation4], 1

</llo_original>
